<compile_context>
chip_gen: v7x
topology: tpu7x:2x2x1
jax: 0.10.0
libtpu: 0.0.40
codegen_flags: <defaults>
</compile_context>

<pallas_src>
import jax
import jax.numpy as jnp
from jax import lax
from jax.experimental import pallas as pl
from jax.experimental.pallas import tpu as pltpu

_EPS = 1e-12            # F.normalize default eps
_EPS2 = _EPS * _EPS     # compared against the sum of squares
_TM_TARGET = 1024       # sublane-axis tile of the resident f1 block (multiple of 8)
_TN_TARGET = 512        # lane-axis tile of the output (multiple of 128, lane-dense)


def _corr_kernel(f1_ref, inv1_ref, f2_ref, inv2_ref, o_ref, f1n_ref):
    # f1_ref:   (1, tm, D)  input dtype    resident across the innermost j axis
    # inv1_ref: (1, tm, 1)  f32            resident across the innermost j axis
    # f2_ref:   (1, tn, D)  matmul dtype   streams along j
    # inv2_ref: (1, 1, tn)  f32            streams along j
    # o_ref:    (1, tm, tn) output dtype
    # f1n_ref:  (tm, D)     matmul dtype   VMEM scratch: normalized f1 tile
    j = pl.program_id(2)

    @pl.when(j == 0)
    def _():
        # Normalize the resident f1 tile once per (b, i) block (PyTorch order:
        # normalize first, then matmul in the input/matmul dtype).
        f1 = f1_ref[0].astype(jnp.float32) * inv1_ref[0]         # (tm, D) f32
        f1n_ref[...] = f1.astype(f1n_ref.dtype)

    # MXU matmul with f32 accumulation, contracting the last dim of both
    # operands (no materialized f2.T / XLU transpose).
    raw = lax.dot_general(
        f1n_ref[...], f2_ref[0],
        dimension_numbers=(((1,), (1,)), ((), ())),
        preferred_element_type=jnp.float32)                      # (tm, tn)

    scaled = raw * inv2_ref[0]                                   # * (1, tn)
    o_ref[0] = (scaled * scaled).astype(o_ref.dtype)


def _round_up(x, q):
    return ((x + q - 1) // q) * q


def _vmem_budget_bytes():
    """Per-generation scoped-VMEM budget with headroom below physical."""
    cap = 64 << 20                      # conservative default (v7x-class)
    try:
        info = pltpu.get_tpu_info()
        cap = int(getattr(info, "vmem_capacity_bytes", cap))
    except Exception:
        pass
    if cap <= (64 << 20):
        # v7x: 64 MiB physical -> ~52 MiB scoped (Mosaic scratch headroom).
        return max(cap - (12 << 20), 32 << 20)
    # v5e / v6e: 128 MiB physical -> ~104 MiB scoped.
    return min(cap - (24 << 20), 112 << 20)


def _vmem_need(tm, tn, D, it1, it_mm, ito):
    """Double-buffered pipelined blocks + scratch + in-kernel f32 temporaries."""
    return (2 * tm * D * it1            # f1 blocks
            + 2 * tn * D * it_mm        # f2 blocks
            + 2 * tm * 128 * 4          # inv1 blocks ((tm,1) f32, lane-padded)
            + 2 * 8 * tn * 4            # inv2 blocks ((1,tn) f32, sublane-padded)
            + 2 * tm * tn * ito         # output blocks
            + tm * D * it_mm            # f1n scratch
            + 2 * tm * tn * 4)          # raw / scaled f32 temporaries


def _select_tiles(N1, N2, D, it1, it_mm, ito, budget):
    tm = min(_TM_TARGET, _round_up(N1, 8))
    tn = min(_TN_TARGET, _round_up(N2, 128))
    # Shrink tn first (does not change HBM traffic), then tm (which does).
    while _vmem_need(tm, tn, D, it1, it_mm, ito) > budget:
        if tn > 128:
            tn = max(128, ((tn // 2) // 128) * 128)
        elif tm > 8:
            tm = max(8, ((tm // 2) // 8) * 8)
        else:
            break
    return tm, tn


def correspondence_head(features_1, features_2, *, tm=None, tn=None,
                        bf16_matmul=False):
    """features_1: (B, N1, D), features_2: (B, N2, D) -> (B, N1, N2)."""
    B, N1, D = features_1.shape
    B2, N2, D2 = features_2.shape
    assert B == B2 and D == D2, "batch / embedding dims must match"

    out_dtype = jnp.promote_types(features_1.dtype, features_2.dtype)
    mm_dtype = (jnp.bfloat16 if (bf16_matmul and out_dtype == jnp.float32)
                else out_dtype)

    f1 = features_1
    f2 = features_2.astype(mm_dtype)    # f2 is re-streamed -> keep in matmul dtype

    it1 = jnp.dtype(f1.dtype).itemsize
    it_mm = jnp.dtype(mm_dtype).itemsize
    ito = jnp.dtype(out_dtype).itemsize

    budget = _vmem_budget_bytes()
    if tm is None or tn is None:
        auto_tm, auto_tn = _select_tiles(N1, N2, D, it1, it_mm, ito, budget)
        tm = auto_tm if tm is None else tm
        tn = auto_tn if tn is None else tn
    assert tm % 8 == 0 and tn % 128 == 0, "tm must be a /8, tn a /128 multiple"

    # Pad N1 / N2 up to the tile quantum. Zero-padded rows/cols produce exact
    # zeros (0 * inv = 0, dot with zero rows = 0) and are sliced off afterwards.
    N1p, N2p = _round_up(N1, tm), _round_up(N2, tn)
    if N1p != N1:
        f1 = jnp.pad(f1, ((0, 0), (0, N1p - N1), (0, 0)))
    if N2p != N2:
        f2 = jnp.pad(f2, ((0, 0), (0, N2p - N2), (0, 0)))

    # Inverse L2 norms (f32), precomputed outside the kernel.
    # rsqrt(max(sumsq, eps^2)) == 1 / max(||x||, eps)  (F.normalize semantics).
    f1_f32 = f1.astype(jnp.float32)
    f2_f32 = f2.astype(jnp.float32)
    inv1 = lax.rsqrt(jnp.maximum(
        jnp.sum(f1_f32 * f1_f32, axis=-1, keepdims=True), _EPS2))   # (B, N1p, 1)
    inv2 = lax.rsqrt(jnp.maximum(
        jnp.sum(f2_f32 * f2_f32, axis=-1), _EPS2))[:, None, :]      # (B, 1, N2p)

    grid_m, grid_n = N1p // tm, N2p // tn
    # j (N2 tiles) innermost: the f1 / inv1 block indices are constant across
    # it, so the big resident tile is DMA'd only once per (b, i).
    grid = (B, grid_m, grid_n)

    vmem_limit = int(budget)

    cost = pl.CostEstimate(
        flops=2 * B * N1p * N2p * D,
        transcendentals=0,
        bytes_accessed=(B * N1p * D * it1                    # f1 read once
                        + B * grid_m * N2p * D * it_mm       # f2 re-streamed
                        + B * N1p * 4 + B * grid_m * N2p * 4 # inv vectors
                        + B * N1p * N2p * ito),              # output written once
    )

    out = pl.pallas_call(
        _corr_kernel,
        out_shape=jax.ShapeDtypeStruct((B, N1p, N2p), out_dtype),
        grid_spec=pltpu.PrefetchScalarGridSpec(
            num_scalar_prefetch=0,
            grid=grid,
            in_specs=[
                pl.BlockSpec((1, tm, D), lambda b, i, j: (b, i, 0)),
                pl.BlockSpec((1, tm, 1), lambda b, i, j: (b, i, 0)),
                pl.BlockSpec((1, tn, D), lambda b, i, j: (b, j, 0)),
                pl.BlockSpec((1, 1, tn), lambda b, i, j: (b, 0, j)),
            ],
            out_specs=pl.BlockSpec((1, tm, tn), lambda b, i, j: (b, i, j)),
            scratch_shapes=[pltpu.VMEM((tm, D), mm_dtype)],
        ),
        compiler_params=pltpu.CompilerParams(
            # j must run in order on one core (f1n scratch written at j == 0);
            # b and i are megacore-shardable.
            dimension_semantics=("parallel", "parallel", "arbitrary"),
            vmem_limit_bytes=vmem_limit,
        ),
        cost_estimate=cost,
    )(f1, inv1, f2, inv2)

    if N1p != N1 or N2p != N2:
        out = out[:, :N1, :N2]
    return out


def _reference(features_1, features_2):
    f1 = features_1.astype(jnp.float32)
    f2 = features_2.astype(jnp.float32)
    n1 = jnp.maximum(jnp.linalg.norm(f1, axis=-1, keepdims=True), _EPS)
    n2 = jnp.maximum(jnp.linalg.norm(f2, axis=-1, keepdims=True), _EPS)
    c = jnp.einsum("bnd,bmd->bnm", f1 / n1, f2 / n2)
    return c * c


if __name__ == "__main__":
    key = jax.random.PRNGKey(0)
    k1, k2, k3, k4, k5, k6, k7, k8 = jax.random.split(key, 8)

    # Case 1: small shapes, auto tiles (N2 padded 16 -> 128, sliced back).
    B, N1, N2, D = 2, 16, 16, 32
    f1 = jax.random.normal(k1, (B, N1, D), dtype=jnp.float32)
    f2 = jax.random.normal(k2, (B, N2, D), dtype=jnp.float32)
    out = jax.block_until_ready(correspondence_head(f1, f2))
    ref = _reference(f1, f2)
    assert out.shape == (B, N1, N2) and out.dtype == jnp.float32
    assert jnp.allclose(out, ref, atol=1e-4, rtol=1e-4), "case 1 mismatch"

    # Case 2: tiled grid with remainders on both N1 and N2 (pad + slice),
    # exercising f1-tile residency across the innermost N2 axis.
    B, N1, N2, D = 2, 100, 160, 48
    f1 = jax.random.normal(k3, (B, N1, D), dtype=jnp.float32)
    f2 = jax.random.normal(k4, (B, N2, D), dtype=jnp.float32)
    out = jax.block_until_ready(correspondence_head(f1, f2, tm=32, tn=128))
    ref = _reference(f1, f2)
    assert out.shape == (B, N1, N2)
    assert jnp.allclose(out, ref, atol=1e-4, rtol=1e-4), "case 2 mismatch"

    # Case 3: bf16 inputs -> bf16 output (bf16 MXU matmul, f32 accumulation).
    B, N1, N2, D = 2, 64, 128, 32
    f1 = jax.random.normal(k5, (B, N1, D), dtype=jnp.bfloat16)
    f2 = jax.random.normal(k6, (B, N2, D), dtype=jnp.bfloat16)
    out = jax.block_until_ready(correspondence_head(f1, f2, tm=32, tn=128))
    ref = _reference(f1, f2)
    assert out.shape == (B, N1, N2) and out.dtype == jnp.bfloat16
    assert jnp.allclose(out.astype(jnp.float32), ref, atol=3e-2, rtol=3e-2), \
        "case 3 mismatch"

    # Case 4: f32 inputs with the optional bf16-matmul fast path (looser
    # numerics by design; output stays f32).
    B, N1, N2, D = 2, 32, 128, 32
    f1 = jax.random.normal(k7, (B, N1, D), dtype=jnp.float32)
    f2 = jax.random.normal(k8, (B, N2, D), dtype=jnp.float32)
    out = jax.block_until_ready(
        correspondence_head(f1, f2, tm=32, tn=128, bf16_matmul=True))
    ref = _reference(f1, f2)
    assert out.shape == (B, N1, N2) and out.dtype == jnp.float32
    assert jnp.allclose(out, ref, atol=6e-2, rtol=6e-2), "case 4 mismatch"

    print("KERNEL_OK")
</pallas_src>

<mosaic_0001>
module attributes {stable_mosaic.version = 11 : i64} {
  func.func @_corr_kernel(%arg0: i32, %arg1: i32, %arg2: i32, %arg3: memref<1x16x32xf32, #tpu.memory_space<vmem>>, %arg4: memref<1x16x1xf32, #tpu.memory_space<vmem>>, %arg5: memref<1x128x32xf32, #tpu.memory_space<vmem>>, %arg6: memref<1x1x128xf32, #tpu.memory_space<vmem>>, %arg7: memref<1x16x128xf32, #tpu.memory_space<vmem>>, %arg8: memref<16x32xf32, #tpu.memory_space<vmem>>) attributes {dimension_semantics = [#tpu.dimension_semantics<parallel>, #tpu.dimension_semantics<parallel>, #tpu.dimension_semantics<arbitrary>], iteration_bounds = array<i64: 2, 1, 1>, scalar_prefetch = 0 : i64, scratch_operands = 1 : i64, tpu.core_type = #tpu.core_type<tc>, window_params = [{transform_indices = @transform_0, window_bounds = array<i64: 1, 16, 32>}, {transform_indices = @transform_1, window_bounds = array<i64: 1, 16, 1>}, {transform_indices = @transform_2, window_bounds = array<i64: 1, 128, 32>}, {transform_indices = @transform_3, window_bounds = array<i64: 1, 1, 128>}, {transform_indices = @transform_4, window_bounds = array<i64: 1, 16, 128>}]} {
    %c0_i32 = arith.constant 0 : i32
    %0 = arith.cmpi eq, %arg2, %c0_i32 : i32
    %1 = arith.extui %0 : i1 to i32
    %c0_i32_0 = arith.constant 0 : i32
    %2 = arith.cmpi ne, %1, %c0_i32_0 : i32
    scf.if %2 {
      %c0_11 = arith.constant 0 : index
      %c0_12 = arith.constant 0 : index
      %c0_13 = arith.constant 0 : index
      %15 = vector.load %arg3[%c0_11, %c0_12, %c0_13] : memref<1x16x32xf32, #tpu.memory_space<vmem>>, vector<1x16x32xf32>
      %16 = vector.shape_cast %15 : vector<1x16x32xf32> to vector<16x32xf32>
      %c0_14 = arith.constant 0 : index
      %c0_15 = arith.constant 0 : index
      %c0_16 = arith.constant 0 : index
      %17 = vector.load %arg4[%c0_14, %c0_15, %c0_16] : memref<1x16x1xf32, #tpu.memory_space<vmem>>, vector<1x16x1xf32>
      %18 = vector.shape_cast %17 : vector<1x16x1xf32> to vector<16x1xf32>
      %19 = vector.broadcast %18 : vector<16x1xf32> to vector<16x32xf32>
      %20 = arith.mulf %16, %19 : vector<16x32xf32>
      %c0_17 = arith.constant 0 : index
      %c0_18 = arith.constant 0 : index
      %21 = vector.load %arg8[%c0_17, %c0_18] : memref<16x32xf32, #tpu.memory_space<vmem>>, vector<16x32xf32>
      tpu.vector_store %arg8[%c0_17, %c0_18], %20 {strides = array<i32>} : memref<16x32xf32, #tpu.memory_space<vmem>>, vector<16x32xf32>,
    } else {
    }
    %c0 = arith.constant 0 : index
    %c0_1 = arith.constant 0 : index
    %3 = vector.load %arg8[%c0, %c0_1] : memref<16x32xf32, #tpu.memory_space<vmem>>, vector<16x32xf32>
    %c0_2 = arith.constant 0 : index
    %c0_3 = arith.constant 0 : index
    %c0_4 = arith.constant 0 : index
    %4 = vector.load %arg5[%c0_2, %c0_3, %c0_4] : memref<1x128x32xf32, #tpu.memory_space<vmem>>, vector<1x128x32xf32>
    %5 = vector.shape_cast %4 : vector<1x128x32xf32> to vector<128x32xf32>
    %cst = arith.constant dense<0.000000e+00> : vector<16x128xf32>
    %6 = tpu.matmul %3, %5, %cst {dimension_numbers = #tpu.dot_dimension_numbers<[1], [1], [0], [0], [0, 0, 1, 0], [], []>} : vector<16x32xf32>, vector<128x32xf32>, vector<16x128xf32> -> vector<16x128xf32>
    %c0_5 = arith.constant 0 : index
    %c0_6 = arith.constant 0 : index
    %c0_7 = arith.constant 0 : index
    %7 = vector.load %arg6[%c0_5, %c0_6, %c0_7] : memref<1x1x128xf32, #tpu.memory_space<vmem>>, vector<1x1x128xf32>
    %8 = vector.shape_cast %7 : vector<1x1x128xf32> to vector<1x128xf32>
    %9 = vector.broadcast %8 : vector<1x128xf32> to vector<16x128xf32>
    %10 = arith.mulf %6, %9 : vector<16x128xf32>
    %11 = arith.mulf %10, %10 : vector<16x128xf32>
    %c0_8 = arith.constant 0 : index
    %c0_9 = arith.constant 0 : index
    %c0_10 = arith.constant 0 : index
    %12 = vector.load %arg7[%c0_8, %c0_9, %c0_10] : memref<1x16x128xf32, #tpu.memory_space<vmem>>, vector<1x16x128xf32>
    %13 = vector.shape_cast %12 : vector<1x16x128xf32> to vector<16x128xf32>
    %14 = vector.shape_cast %11 : vector<16x128xf32> to vector<1x16x128xf32>
    tpu.vector_store %arg7[%c0_8, %c0_9, %c0_10], %14 {strides = array<i32>} : memref<1x16x128xf32, #tpu.memory_space<vmem>>, vector<1x16x128xf32>,
    return
  }
  func.func @transform_0(%arg0: i32, %arg1: i32, %arg2: i32) -> (i32, i32, i32) {
    %c0_i32 = arith.constant 0 : i32
    %c0_i32_0 = arith.constant 0 : i32
    return %arg0, %arg1, %c0_i32 : i32, i32, i32
  }
  func.func @transform_1(%arg0: i32, %arg1: i32, %arg2: i32) -> (i32, i32, i32) {
    %c0_i32 = arith.constant 0 : i32
    %c0_i32_0 = arith.constant 0 : i32
    return %arg0, %arg1, %c0_i32 : i32, i32, i32
  }
  func.func @transform_2(%arg0: i32, %arg1: i32, %arg2: i32) -> (i32, i32, i32) {
    %c0_i32 = arith.constant 0 : i32
    %c0_i32_0 = arith.constant 0 : i32
    return %arg0, %arg2, %c0_i32 : i32, i32, i32
  }
  func.func @transform_3(%arg0: i32, %arg1: i32, %arg2: i32) -> (i32, i32, i32) {
    %c0_i32 = arith.constant 0 : i32
    %c0_i32_0 = arith.constant 0 : i32
    return %arg0, %c0_i32, %arg2 : i32, i32, i32
  }
  func.func @transform_4(%arg0: i32, %arg1: i32, %arg2: i32) -> (i32, i32, i32) {
    %c0_i32 = arith.constant 0 : i32
    return %arg0, %arg1, %arg2 : i32, i32, i32
  }
}

</mosaic_0001>

<llo_original>
// kernel: tpu_custom_call.1
$region0: #{tpu_custom_call.1}
  #allocation0 [shape = 'u32[]', space=smem, size = 0x4, offset = 0x4, fixed_abs, tag = 'smem constant byte address 0x4 - core index']
  #allocation1 [shape = 'u32[144,128]{1,0:T(1,128)}', space=vmem, size = 0x12000, scoped, tag = 'internal scratch']
  #allocation2 [shape = 'f32[16,32]{1,0:T(8,128)}', space=vmem, size = 0x2000, scoped, tag = 'scratch operand']
  %s0 = inlined_call_operand.vmem [shape: f32[2,16,32], index: 0, kind: input, shape index: {}]
  %s1 = inlined_call_operand.vmem [shape: f32[2,16,1], index: 1, kind: input, shape index: {}]
  %s2 = inlined_call_operand.vmem [shape: f32[2,128,32], index: 2, kind: input, shape index: {}]
  %s3 = inlined_call_operand.vmem [shape: f32[2,1,128], index: 3, kind: input, shape index: {}]
  %s4 = inlined_call_operand.hbm [shape: f32[2,16,128], index: 4, kind: output, shape index: {}]
  %s5 = sld [smem:[#allocation0]]
  $region53: #{tpu_custom_call.1} parent=0
    _
  %s7 = ssub.s32 1, %s5
  %s8 = scalar_select 0, %s7, %s5
  $region1: #{tpu_custom_call.1} parent=0
    #allocation3 [shape = 'u8[16384]{0}', space=vmem, size = 0x4000, scoped, tag = 'output window, operand 0']
    #allocation4 [shape = 's32[2]{0}', space=sflag, size = 0x8, scoped, tag = 'scoped memory for tpu_custom_call.1']
    %9 = vsyncpa [#allocation4], 0
    %s10 = scalar_lea.sflag [#allocation4], 1
    %11 = vsyncpa %s10, 0
    loop: start=0, step=1, limit=4
    $region2: #{tpu_custom_call.1} parent=1 // loop_pre_header
      _
    $region3: #{tpu_custom_call.1} parent=1 // loop_header
      %s13 = sphi 0, %s17
      %p14 = scmp.ge.s32.totalorder %s13, 4
      %s20 = sphi 0, %s39
      %s21 = sphi 0, %s35
      %s22 = sphi 0, %s31
      %s23 = sphi 0, %s20
      %s24 = sphi 0, %s21
      %s25 = sphi 0, %s22
      %s26 = sphi 0, %s23
      %s27 = sphi 0, %s24
      %s28 = sphi 0, %s25
      %s44 = sphi 0, %s46
      %s47 = sphi 0, %s44
      %s48 = sphi 0, %s47
      %s64 = sphi 0, %s48
      %s72 = sphi 0, %s74
      %s75 = sphi 0, %s72
      %s76 = sphi 0, %s75
      %s92 = sphi 0, %s76
      %s100 = sphi 0, %s102
      %s103 = sphi 0, %s100
      %s104 = sphi 0, %s103
      %s120 = sphi 0, %s104
      %s128 = sphi 0, %s130
      %s131 = sphi 0, %s128
      %s132 = sphi 0, %s131
      %s148 = sphi 0, %s132
      %s158 = sphi 0, %s160
      %s161 = sphi 0, %s158
      %s162 = sphi 0, %s161
      %s178 = sphi 0, %s162
    $region4: #{tpu_custom_call.1} parent=1 // loop_header_branch
      %16 = sbr.rel (%p14) target = $region8
    $region5: #{tpu_custom_call.1} parent=1 // loop_body
      %s18 = ssub.s32 %s13, 1
      %s19 = ssub.s32 %s13, 2
      %s29 = sadd.s32 1, %s22
      %p30 = scmp.ge.s32.totalorder %s29, 1
      %s31 = scalar_select %p30, 0, %s29
      %s32 = sadd.s32 1, %s21
      %s33 = scalar_select %p30, %s32, %s21
      %p34 = scmp.ge.s32.totalorder %s33, 1
      %s35 = scalar_select %p34, 0, %s33
      %s36 = sadd.s32 1, %s20
      %s37 = scalar_select %p34, %s36, %s20
      %p38 = scmp.ge.s32.totalorder %s37, 2
      %s39 = scalar_select %p38, 0, %s37
      %s40 = ssub.s32 %s20, %s39
      %s41 = ssub.s32 %s21, %s35
      %s42 = sor.u32 %s40, %s41
      %p43 = scmp.eq.s32.totalorder %s42, 0
      %s45 = sadd.s32 %s44, 1
      %s46 = scalar_select %p43, %s44, %s45
      %p49 = pneg %p43
      %p50 = scmp.eq.s32.totalorder %s13, 1
      %p51 = por %p49, %p50
      %p52 = scmp.ne.s32.totalorder %s44, %s47
      %p53 = scmp.eq.s32.totalorder %s13, 0
      %p54 = por %p52, %p53
      %p55 = scmp.ne.s32.totalorder %s44, %s47
      %p56 = scmp.eq.s32.totalorder %s18, 1
      %p57 = por %p55, %p56
      %p58 = scmp.ne.s32.totalorder %s47, %s48
      %p59 = scmp.eq.s32.totalorder %s18, 0
      %p60 = por %p58, %p59
      %p61 = scmp.ne.s32.totalorder %s47, %s48
      %p62 = scmp.eq.s32.totalorder %s19, 1
      %p63 = por %p61, %p62
      %p65 = scmp.ne.s32.totalorder %s48, %s64
      %p66 = scmp.eq.s32.totalorder %s19, 0
      %p67 = por %p65, %p66
      %s68 = ssub.s32 %s20, %s39
      %s69 = ssub.s32 %s21, %s35
      %s70 = sor.u32 %s68, %s69
      %p71 = scmp.eq.s32.totalorder %s70, 0
      %s73 = sadd.s32 %s72, 1
      %s74 = scalar_select %p71, %s72, %s73
      %p77 = pneg %p71
      %p78 = scmp.eq.s32.totalorder %s13, 1
      %p79 = por %p77, %p78
      %p80 = scmp.ne.s32.totalorder %s72, %s75
      %p81 = scmp.eq.s32.totalorder %s13, 0
      %p82 = por %p80, %p81
      %p83 = scmp.ne.s32.totalorder %s72, %s75
      %p84 = scmp.eq.s32.totalorder %s18, 1
      %p85 = por %p83, %p84
      %p86 = scmp.ne.s32.totalorder %s75, %s76
      %p87 = scmp.eq.s32.totalorder %s18, 0
      %p88 = por %p86, %p87
      %p89 = scmp.ne.s32.totalorder %s75, %s76
      %p90 = scmp.eq.s32.totalorder %s19, 1
      %p91 = por %p89, %p90
      %p93 = scmp.ne.s32.totalorder %s76, %s92
      %p94 = scmp.eq.s32.totalorder %s19, 0
      %p95 = por %p93, %p94
      %s96 = ssub.s32 %s20, %s39
      %s97 = ssub.s32 %s22, %s31
      %s98 = sor.u32 %s96, %s97
      %p99 = scmp.eq.s32.totalorder %s98, 0
      %s101 = sadd.s32 %s100, 1
      %s102 = scalar_select %p99, %s100, %s101
      %p105 = pneg %p99
      %p106 = scmp.eq.s32.totalorder %s13, 1
      %p107 = por %p105, %p106
      %p108 = scmp.ne.s32.totalorder %s100, %s103
      %p109 = scmp.eq.s32.totalorder %s13, 0
      %p110 = por %p108, %p109
      %p111 = scmp.ne.s32.totalorder %s100, %s103
      %p112 = scmp.eq.s32.totalorder %s18, 1
      %p113 = por %p111, %p112
      %p114 = scmp.ne.s32.totalorder %s103, %s104
      %p115 = scmp.eq.s32.totalorder %s18, 0
      %p116 = por %p114, %p115
      %p117 = scmp.ne.s32.totalorder %s103, %s104
      %p118 = scmp.eq.s32.totalorder %s19, 1
      %p119 = por %p117, %p118
      %p121 = scmp.ne.s32.totalorder %s104, %s120
      %p122 = scmp.eq.s32.totalorder %s19, 0
      %p123 = por %p121, %p122
      %s124 = ssub.s32 %s20, %s39
      %s125 = ssub.s32 %s22, %s31
      %s126 = sor.u32 %s124, %s125
      %p127 = scmp.eq.s32.totalorder %s126, 0
      %s129 = sadd.s32 %s128, 1
      %s130 = scalar_select %p127, %s128, %s129
      %p133 = pneg %p127
      %p134 = scmp.eq.s32.totalorder %s13, 1
      %p135 = por %p133, %p134
      %p136 = scmp.ne.s32.totalorder %s128, %s131
      %p137 = scmp.eq.s32.totalorder %s13, 0
      %p138 = por %p136, %p137
      %p139 = scmp.ne.s32.totalorder %s128, %s131
      %p140 = scmp.eq.s32.totalorder %s18, 1
      %p141 = por %p139, %p140
      %p142 = scmp.ne.s32.totalorder %s131, %s132
      %p143 = scmp.eq.s32.totalorder %s18, 0
      %p144 = por %p142, %p143
      %p145 = scmp.ne.s32.totalorder %s131, %s132
      %p146 = scmp.eq.s32.totalorder %s19, 1
      %p147 = por %p145, %p146
      %p149 = scmp.ne.s32.totalorder %s132, %s148
      %p150 = scmp.eq.s32.totalorder %s19, 0
      %p151 = por %p149, %p150
      %s152 = ssub.s32 %s20, %s39
      %s153 = ssub.s32 %s21, %s35
      %s154 = sor.u32 %s152, %s153
      %s155 = ssub.s32 %s22, %s31
      %s156 = sor.u32 %s154, %s155
      %p157 = scmp.eq.s32.totalorder %s156, 0
      %s159 = sadd.s32 %s158, 1
      %s160 = scalar_select %p157, %s158, %s159
      %p163 = pneg %p157
      %p164 = scmp.eq.s32.totalorder %s13, 1
      %p165 = por %p163, %p164
      %p166 = scmp.ne.s32.totalorder %s158, %s161
      %p167 = scmp.eq.s32.totalorder %s13, 0
      %p168 = por %p166, %p167
      %p169 = scmp.ne.s32.totalorder %s158, %s161
      %p170 = scmp.eq.s32.totalorder %s18, 1
      %p171 = por %p169, %p170
      %p172 = scmp.ne.s32.totalorder %s161, %s162
      %p173 = scmp.eq.s32.totalorder %s18, 0
      %p174 = por %p172, %p173
      %p175 = scmp.ne.s32.totalorder %s161, %s162
      %p176 = scmp.eq.s32.totalorder %s19, 1
      %p177 = por %p175, %p176
      %p179 = scmp.ne.s32.totalorder %s162, %s178
      %p180 = scmp.eq.s32.totalorder %s19, 0
      %p181 = por %p179, %p180
      %p182 = scmp.le.s32.totalorder 1, %s13
      %p183 = scmp.lt.s32.totalorder %s13, 3
      %p184 = pnand %p182, %p183
      %p185 = pneg %p184
      // Predicated region
      $region9: #{tpu_custom_call.1} parent=5 // pred_check
        _
      $region10: #{tpu_custom_call.1} parent=5 // pred_check_branch
        %187 = sbr.rel (%p184) target = $region12
      $region11: #{tpu_custom_call.1} parent=5 // pred_region
        %s188 = ssub.s32 %s13, 1
      $region12: #{tpu_custom_call.1} parent=5 // pred_fallthru
        _
      %p189 = scmp.lt.s32.totalorder %s13, 2
      // Predicated region
      $region13: #{tpu_custom_call.1} parent=5 // pred_check
        %p190 = pneg %p189
      $region14: #{tpu_custom_call.1} parent=5 // pred_check_branch
        %192 = sbr.rel (%p190) target = $region16
      $region15: #{tpu_custom_call.1} parent=5 // pred_region
        // Predicated region
        $region17: #{tpu_custom_call.1} parent=15 // pred_check
          %p193 = pneg %p54
        $region18: #{tpu_custom_call.1} parent=15 // pred_check_branch
          %195 = sbr.rel (%p193) target = $region20
        $region19: #{tpu_custom_call.1} parent=15 // pred_region
          %s196 = smul.u32 2, %s21
          %p197 = scmp.lt.s32.totalorder %s20, 1
          %s198 = scalar_select %p197, %s20, 1
          %p199 = scmp.lt.s32.totalorder %s196, 1
          %s200 = scalar_select %p199, %s196, 1
          %s201 = smul.addr %s198, 2
          %s202 = sadd.s32 %s200, %s201
          %s203 = smul.addr %s202, 8
          %s204 = scalar_lea.vmem %s0, %s203
          %s205 = smul.u32 2, %s21
        $region20: #{tpu_custom_call.1} parent=15 // pred_fallthru
          _
        // Predicated region
        $region21: #{tpu_custom_call.1} parent=15 // pred_check
          %p206 = pneg %p82
        $region22: #{tpu_custom_call.1} parent=15 // pred_check_branch
          %208 = sbr.rel (%p206) target = $region24
        $region23: #{tpu_custom_call.1} parent=15 // pred_region
          %s209 = smul.u32 2, %s21
          %p210 = scmp.lt.s32.totalorder %s20, 1
          %s211 = scalar_select %p210, %s20, 1
          %p212 = scmp.lt.s32.totalorder %s209, 1
          %s213 = scalar_select %p212, %s209, 1
          %s214 = smul.addr %s211, 2
          %s215 = sadd.s32 %s213, %s214
          %s216 = smul.addr %s215, 8
          %s217 = scalar_lea.vmem %s1, %s216
          %s218 = smul.u32 2, %s21
        $region24: #{tpu_custom_call.1} parent=15 // pred_fallthru
          _
        // Predicated region
        $region25: #{tpu_custom_call.1} parent=15 // pred_check
          %p219 = pneg %p110
        $region26: #{tpu_custom_call.1} parent=15 // pred_check_branch
          %221 = sbr.rel (%p219) target = $region28
        $region27: #{tpu_custom_call.1} parent=15 // pred_region
          %s222 = smul.u32 16, %s22
          %p223 = scmp.lt.s32.totalorder %s20, 1
          %s224 = scalar_select %p223, %s20, 1
          %p225 = scmp.lt.s32.totalorder %s222, 15
          %s226 = scalar_select %p225, %s222, 15
          %s227 = smul.addr %s224, 16
          %s228 = sadd.s32 %s226, %s227
          %s229 = smul.addr %s228, 8
          %s230 = scalar_lea.vmem %s2, %s229
          %s231 = smul.u32 16, %s22
        $region28: #{tpu_custom_call.1} parent=15 // pred_fallthru
          _
        // Predicated region
        $region29: #{tpu_custom_call.1} parent=15 // pred_check
          %p232 = pneg %p138
        $region30: #{tpu_custom_call.1} parent=15 // pred_check_branch
          %234 = sbr.rel (%p232) target = $region32
        $region31: #{tpu_custom_call.1} parent=15 // pred_region
          %p235 = scmp.lt.s32.totalorder %s20, 1
          %s236 = scalar_select %p235, %s20, 1
          %p237 = scmp.lt.s32.totalorder %s22, 0
          %s238 = scalar_select %p237, %s22, 0
          %s239 = sadd.s32 %s238, %s236
          %s240 = scalar_lea.vmem %s3, %s239
        $region32: #{tpu_custom_call.1} parent=15 // pred_fallthru
          _
      $region16: #{tpu_custom_call.1} parent=5 // pred_fallthru
        _
      %p241 = scmp.le.s32.totalorder 1, %s13
      %p242 = scmp.lt.s32.totalorder %s13, 3
      %p243 = pnand %p241, %p242
      %p244 = pneg %p243
      // Predicated region
      $region33: #{tpu_custom_call.1} parent=5 // pred_check
        _
      $region34: #{tpu_custom_call.1} parent=5 // pred_check_branch
        %246 = sbr.rel (%p243) target = $region36
      $region35: #{tpu_custom_call.1} parent=5 // pred_region
        %s247 = ssub.s32 %s13, 1
        %s248 = smul.u32 2, %s24
        %p249 = scmp.lt.s32.totalorder %s23, 1
        %s250 = scalar_select %p249, %s23, 1
        %p251 = scmp.lt.s32.totalorder %s248, 1
        %s252 = scalar_select %p251, %s248, 1
        %s253 = smul.addr %s250, 2
        %s254 = sadd.s32 %s252, %s253
        %s255 = smul.addr %s254, 8
        %s256 = scalar_lea.vmem %s0, %s255
        %p257 = pneg %p60
        %p258 = pneg %p57
        %s259 = smul.u32 2, %s24
        %p260 = scmp.lt.s32.totalorder %s23, 1
        %s261 = scalar_select %p260, %s23, 1
        %p262 = scmp.lt.s32.totalorder %s259, 1
        %s263 = scalar_select %p262, %s259, 1
        %s264 = smul.addr %s261, 2
        %s265 = sadd.s32 %s263, %s264
        %s266 = smul.addr %s265, 8
        %s267 = scalar_lea.vmem %s1, %s266
        %p268 = pneg %p88
        %p269 = pneg %p85
        %s270 = smul.u32 16, %s25
        %p271 = scmp.lt.s32.totalorder %s23, 1
        %s272 = scalar_select %p271, %s23, 1
        %p273 = scmp.lt.s32.totalorder %s270, 15
        %s274 = scalar_select %p273, %s270, 15
        %s275 = smul.addr %s272, 16
        %s276 = sadd.s32 %s274, %s275
        %s277 = smul.addr %s276, 8
        %s278 = scalar_lea.vmem %s2, %s277
        %p279 = pneg %p116
        %p280 = pneg %p113
        %p281 = scmp.lt.s32.totalorder %s23, 1
        %s282 = scalar_select %p281, %s23, 1
        %p283 = scmp.lt.s32.totalorder %s25, 0
        %s284 = scalar_select %p283, %s25, 0
        %s285 = sadd.s32 %s284, %s282
        %s286 = scalar_lea.vmem %s3, %s285
        %p287 = pneg %p144
        %p288 = pneg %p141
        %p289 = pneg %p174
        %p290 = pneg %p171
        %s291 = sand.u32 %s161, 1
        %s292 = scalar_lea.sflag [#allocation4], %s291
        %s293 = sand.u32 %s161, 1
        %s294 = smul.addr %s293, 16
        %s295 = scalar_lea.vmem [#allocation3], %s294
        %s296 = smul.u32 2, %s24
        %p297 = scmp.lt.s32.totalorder %s23, 1
        %s298 = scalar_select %p297, %s23, 1
        %p299 = scmp.lt.s32.totalorder %s296, 1
        %s300 = scalar_select %p299, %s296, 1
        %s301 = smul.addr %s298, 2
        %s302 = sadd.s32 %s300, %s301
        %s303 = smul.addr %s302, 8
        %s304 = scalar_lea.vmem %s0, %s303
        %s305 = smul.u32 2, %s24
        %s306 = smul.u32 2, %s24
        %p307 = scmp.lt.s32.totalorder %s23, 1
        %s308 = scalar_select %p307, %s23, 1
        %p309 = scmp.lt.s32.totalorder %s306, 1
        %s310 = scalar_select %p309, %s306, 1
        %s311 = smul.addr %s308, 2
        %s312 = sadd.s32 %s310, %s311
        %s313 = smul.addr %s312, 8
        %s314 = scalar_lea.vmem %s1, %s313
        %s315 = smul.u32 2, %s24
        %s316 = smul.u32 16, %s25
        %p317 = scmp.lt.s32.totalorder %s23, 1
        %s318 = scalar_select %p317, %s23, 1
        %p319 = scmp.lt.s32.totalorder %s316, 15
        %s320 = scalar_select %p319, %s316, 15
        %s321 = smul.addr %s318, 16
        %s322 = sadd.s32 %s320, %s321
        %s323 = smul.addr %s322, 8
        %s324 = scalar_lea.vmem %s2, %s323
        %s325 = smul.u32 16, %s25
        %p326 = scmp.lt.s32.totalorder %s23, 1
        %s327 = scalar_select %p326, %s23, 1
        %p328 = scmp.lt.s32.totalorder %s25, 0
        %s329 = scalar_select %p328, %s25, 0
        %s330 = sadd.s32 %s329, %s327
        %s331 = scalar_lea.vmem %s3, %s330
        %s332 = smul.u32 2, %s24
        %p333 = scmp.eq.s32.totalorder %s25, 0
        // Predicated region
        $region37: #{tpu_custom_call.1} parent=35 // pred_check
          %p334 = pneg %p333
        $region38: #{tpu_custom_call.1} parent=35 // pred_check_branch
          %336 = sbr.rel (%p334) target = $region40
        $region39: #{tpu_custom_call.1} parent=35 // pred_region
          %v337 = vld [vmem:[%s304] sm:$0xff]
          %v338 = vld [vmem:[%s304 + $0x8] sm:$0xff]
          %v339 = vld [vmem:[%s314] sm:$0xff]
          %v340 = vld [vmem:[%s314 + $0x8] sm:$0xff]
          %342 = vset.pattern.permute.xlu0 0
          %343 = vperm.xlu0 %342, %v339
          %v344 = vpop.permute.xlu0 %343
          %347 = vset.pattern.permute.xlu0 0
          %348 = vperm.xlu0 %347, %v340
          %v349 = vpop.permute.xlu0 %348
          %v351 = vmul.f32 %v337, %v344
          %v352 = vmul.f32 %v338, %v349
          %vm353 = vcmask 261120
          %354 = vst.msk [vmem:[#allocation2] sm:$0xff] %vm353, %v351
          %355 = vst.msk [vmem:[#allocation2 + $0x8] sm:$0xff] %vm353, %v352
        $region40: #{tpu_custom_call.1} parent=35 // pred_fallthru
          _
        %v356 = vld [vmem:[#allocation2] sm:$0xff]
        %v357 = vld [vmem:[#allocation2 + $0x8] sm:$0xff]
        %v358 = vld [vmem:[%s324] sm:$0xff]
        %v359 = vld [vmem:[%s324 + $0x8] sm:$0xff]
        %v360 = vld [vmem:[%s324 + $0x10] sm:$0xff]
        %v361 = vld [vmem:[%s324 + $0x18] sm:$0xff]
        %v362 = vld [vmem:[%s324 + $0x20] sm:$0xff]
        %v363 = vld [vmem:[%s324 + $0x28] sm:$0xff]
        %v364 = vld [vmem:[%s324 + $0x30] sm:$0xff]
        %v365 = vld [vmem:[%s324 + $0x38] sm:$0xff]
        %v366 = vld [vmem:[%s324 + $0x40] sm:$0xff]
        %v367 = vld [vmem:[%s324 + $0x48] sm:$0xff]
        %v368 = vld [vmem:[%s324 + $0x50] sm:$0xff]
        %v369 = vld [vmem:[%s324 + $0x58] sm:$0xff]
        %v370 = vld [vmem:[%s324 + $0x60] sm:$0xff]
        %v371 = vld [vmem:[%s324 + $0x68] sm:$0xff]
        %v372 = vld [vmem:[%s324 + $0x70] sm:$0xff]
        %v373 = vld [vmem:[%s324 + $0x78] sm:$0xff]
        %vm374 = vcmask 261120
        %v376 = vsel %vm374, %v356, 0
        %v379 = vsel %vm374, %v357, 0
        %v382 = vsel %vm374, %v358, 0
        %v385 = vsel %vm374, %v359, 0
        %v388 = vsel %vm374, %v360, 0
        %v391 = vsel %vm374, %v361, 0
        %v394 = vsel %vm374, %v362, 0
        %v397 = vsel %vm374, %v363, 0
        %v400 = vsel %vm374, %v364, 0
        %v403 = vsel %vm374, %v365, 0
        %v406 = vsel %vm374, %v366, 0
        %v409 = vsel %vm374, %v367, 0
        %v412 = vsel %vm374, %v368, 0
        %v415 = vsel %vm374, %v369, 0
        %v418 = vsel %vm374, %v370, 0
        %v421 = vsel %vm374, %v371, 0
        %v424 = vsel %vm374, %v372, 0
        %v427 = vsel %vm374, %v373, 0
        %429 = vmatprep.subr.mxu0 0.0
        %430 = vmatpush1.xpose.msra.mxu0 %v382
        %431 = vmatprep.subr.mxu0 0.0
        %432 = vmatpush1.xpose.msra.mxu0 %v385
        %433 = vmatprep.subr.mxu0 0.0
        %434 = vmatpush1.xpose.msra.mxu0 %v388
        %435 = vmatprep.subr.mxu0 0.0
        %436 = vmatpush1.xpose.msra.mxu0 %v391
        %437 = vmatprep.subr.mxu0 0.0
        %438 = vmatpush1.xpose.msra.mxu0 %v394
        %439 = vmatprep.subr.mxu0 0.0
        %440 = vmatpush1.xpose.msra.mxu0 %v397
        %441 = vmatprep.subr.mxu0 0.0
        %442 = vmatpush1.xpose.msra.mxu0 %v400
        %443 = vmatprep.subr.mxu0 0.0
        %444 = vmatpush1.xpose.msra.mxu0 %v403
        %445 = vmatprep.subr.mxu0 0.0
        %446 = vmatpush1.xpose.msra.mxu0 %v406
        %447 = vmatprep.subr.mxu0 0.0
        %448 = vmatpush1.xpose.msra.mxu0 %v409
        %449 = vmatprep.subr.mxu0 0.0
        %450 = vmatpush1.xpose.msra.mxu0 %v412
        %451 = vmatprep.subr.mxu0 0.0
        %452 = vmatpush1.xpose.msra.mxu0 %v415
        %453 = vmatprep.subr.mxu0 0.0
        %454 = vmatpush1.xpose.msra.mxu0 %v418
        %455 = vmatprep.subr.mxu0 0.0
        %456 = vmatpush1.xpose.msra.mxu0 %v421
        %457 = vmatprep.subr.mxu0 0.0
        %458 = vmatpush1.xpose.msra.mxu0 %v424
        %459 = vmatprep.subr.mxu0 0.0
        %460 = vmatpush1.xpose.msra.mxu0 %v427
        %461 = vmatprep.subr.mxu0 0.0
        %462 = vmatpush1.xpose.msra.mxu0 0.0
        %463 = vmatprep.subr.mxu0 0.0
        %464 = vmatpush1.xpose.msra.mxu0 0.0
        %465 = vmatprep.subr.mxu0 0.0
        %466 = vmatpush1.xpose.msra.mxu0 0.0
        %467 = vmatprep.subr.mxu0 0.0
        %468 = vmatpush1.xpose.msra.mxu0 0.0
        %469 = vmatprep.subr.mxu0 0.0
        %470 = vmatpush1.xpose.msra.mxu0 0.0
        %471 = vmatprep.subr.mxu0 0.0
        %472 = vmatpush1.xpose.msra.mxu0 0.0
        %473 = vmatprep.subr.mxu0 0.0
        %474 = vmatpush1.xpose.msra.mxu0 0.0
        %475 = vmatprep.subr.mxu0 0.0
        %476 = vmatpush1.xpose.msra.mxu0 0.0
        %477 = vmatprep.subr.mxu0 0.0
        %478 = vmatpush1.xpose.msra.mxu0 0.0
        %479 = vmatprep.subr.mxu0 0.0
        %480 = vmatpush1.xpose.msra.mxu0 0.0
        %481 = vmatprep.subr.mxu0 0.0
        %482 = vmatpush1.xpose.msra.mxu0 0.0
        %483 = vmatprep.subr.mxu0 0.0
        %484 = vmatpush1.xpose.msra.mxu0 0.0
        %485 = vmatprep.subr.mxu0 0.0
        %486 = vmatpush1.xpose.msra.mxu0 0.0
        %487 = vmatprep.subr.mxu0 0.0
        %488 = vmatpush1.xpose.msra.mxu0 0.0
        %489 = vmatprep.subr.mxu0 0.0
        %490 = vmatpush1.xpose.msra.mxu0 0.0
        %491 = vmatprep.subr.mxu0 0.0
        %492 = vmatpush1.xpose.msra.mxu0 0.0
        %493 = vmatprep.mubr.f32.mxu0 0.0
        %494 = vmatmul.mubr.f32.gmra.mrb[0].mxu0 %v376
        %v495 = vpop.f32.mrb[0].mxu0
        %v496 = vadd.f32 0.0, %v495
        %v497 = vpop.f32.mrb[0].mxu0
        %498 = vmatprep.mubr.f32.mxu0 0.0
        %499 = vmatmul.mubr.f32.gmra.mrb[0].mxu0 %v379
        %v500 = vpop.f32.mrb[0].mxu0
        %v501 = vadd.f32 0.0, %v500
        %v502 = vpop.f32.mrb[0].mxu0
        %503 = vdwg.mxu0
        %v504 = vld [vmem:[%s331] sm:$0x1]
        %v506 = vlaneseq
        %v507 = vshrl.u32 %v506, 7
        %v508 = vsub.s32 0, %v507
        %v509 = vrot.slane %v504, %v508
        %v511 = vmul.f32 %v496, %v509
        %v512 = vmul.f32 %v501, %v509
        %v513 = vmul.f32 %v511, %v511
        %v514 = vmul.f32 %v512, %v512
        %515 = vst [vmem:[%s295] sm:$0xff] %v513
        %516 = vst [vmem:[%s295 + $0x8] sm:$0xff] %v514
        %s517 = sand.u32 %s161, 1
        %s518 = scalar_lea.sflag [#allocation4], %s517
        %s519 = sand.u32 %s161, 1
        %s520 = smul.addr %s519, 16
        %s521 = scalar_lea.vmem [#allocation3], %s520
        // Predicated region
        $region41: #{tpu_custom_call.1} parent=35 // pred_check
          %p522 = pneg %p171
        $region42: #{tpu_custom_call.1} parent=35 // pred_check_branch
          %524 = sbr.rel (%p522) target = $region44
        $region43: #{tpu_custom_call.1} parent=35 // pred_region
          %s525 = smul.u32 2, %s24
          %s527 = ssub.s32 256, 256
          %528 = vsyncadd %s518, %s527
          %s529 = sadd.s32 %s25, %s525
          %s530 = smul.addr %s23, 2
          %s531 = sadd.s32 %s529, %s530
          %s532 = smul.addr %s531, 128
          %s533 = scalar_lea.hbm %s4, %s532
          %s534 = sshll.u32 %s521, 4
          %s535 = int_to_ptr.vmem [resolvable:$true] %s534
          %540 = dma.vmem_to_hbm [thread:$0]  %s535, 256, %s533, %s518, 128, 128, 8
        $region44: #{tpu_custom_call.1} parent=35 // pred_fallthru
          _
      $region36: #{tpu_custom_call.1} parent=5 // pred_fallthru
        _
      %p541 = scmp.le.s32.totalorder 2, %s13
      // Predicated region
      $region45: #{tpu_custom_call.1} parent=5 // pred_check
        %p542 = pneg %p541
      $region46: #{tpu_custom_call.1} parent=5 // pred_check_branch
        %544 = sbr.rel (%p542) target = $region48
      $region47: #{tpu_custom_call.1} parent=5 // pred_region
        %s545 = ssub.s32 %s13, 2
        // Predicated region
        $region49: #{tpu_custom_call.1} parent=47 // pred_check
          %p546 = pneg %p177
        $region50: #{tpu_custom_call.1} parent=47 // pred_check_branch
          %548 = sbr.rel (%p546) target = $region52
        $region51: #{tpu_custom_call.1} parent=47 // pred_region
          %s549 = sand.u32 %s162, 1
          %s550 = scalar_lea.sflag [#allocation4], %s549
          %s551 = sand.u32 %s162, 1
          %s552 = smul.addr %s551, 16
          %s553 = scalar_lea.vmem [#allocation3], %s552
          %554 = dma.done %s550, 256
        $region52: #{tpu_custom_call.1} parent=47 // pred_fallthru
          _
      $region48: #{tpu_custom_call.1} parent=5 // pred_fallthru
        _
    $region6: #{tpu_custom_call.1} parent=1 // loop_footer
      %s17 = sadd.s32 1, %s13
    $region7: #{tpu_custom_call.1} parent=1 // loop_footer_branch
      %12 = sbr.rel target = $region3
    $region8: #{tpu_custom_call.1} parent=1 // loop_exit
      _
    %555 = vsyncpa [#allocation4], 1
    %s556 = scalar_lea.sflag [#allocation4], 1
    %557 = vsyncpa %s556, 1

</llo_original>
